<compile_context>
chip_gen: v7x
topology: tpu7x:2x2x1
jax: 0.10.0
libtpu: 0.0.40
codegen_flags: <defaults>
</compile_context>

<pallas_src>
import jax
import jax.numpy as jnp
from jax.experimental import pallas as pl
from jax.experimental.pallas import tpu as pltpu


def _pick_tile(dim, candidates):
    """Largest candidate that exactly divides `dim`, else the full dim."""
    for c in candidates:
        if c <= dim and dim % c == 0:
            return c
    return dim


def _seq_pool_kernel(x_ref, o_ref, acc_ref):
    # x_ref:   VMEM (tb, ts, td)   input tile
    # o_ref:   VMEM (tb, 2, td)    output tile (both concat halves)
    # acc_ref: VMEM (tb, td) f32   running max across the S grid axis
    s = pl.program_id(2)

    @pl.when(s == 0)
    def _():
        acc_ref[...] = jnp.full(acc_ref.shape, -jnp.inf, dtype=acc_ref.dtype)

    # Reduce the sequence (sublane) axis of this tile, then merge into the
    # running max.  Max is exact in the input dtype; cast once afterwards.
    blk_max = jnp.max(x_ref[...], axis=1).astype(jnp.float32)   # (tb, td)
    acc_ref[...] = jnp.maximum(acc_ref[...], blk_max)

    @pl.when(s == pl.num_programs(2) - 1)
    def _():
        m = acc_ref[...].astype(o_ref.dtype)                    # (tb, td)
        # Both "max" and "avg" branches of the torch module are MaxPooling,
        # so both halves of the concat get the same values.
        o_ref[...] = jnp.broadcast_to(m[:, None, :], o_ref.shape)


def sequential_pooling(inputs, pool_mode='MAX_AVG',
                       tb_cands=(8, 4, 2, 1),
                       ts_cands=(256, 128, 64, 32, 16, 8),
                       td_cands=(512, 384, 256, 128)):
    """Pallas equivalent of SequentialPooling.forward(inputs).

    inputs: [bz, seq_len, dim] float array.
    Returns [bz, 2*dim], i.e. cat([max_over_seq, max_over_seq], -1)
    (the original module's 'avg' branch is also a MaxPooling instance).
    """
    # The torch forward unconditionally calls both pools; any mode missing
    # MAX or AVG would crash there, so only MAX_AVG-style modes are supported.
    assert 'MAX' in pool_mode and 'AVG' in pool_mode
    assert inputs.ndim == 3
    B, S, D = inputs.shape

    tb = _pick_tile(B, tb_cands)
    ts = _pick_tile(S, ts_cands)
    td = _pick_tile(D, td_cands)
    grid = (B // tb, D // td, S // ts)

    # TODO(synk): for tiny shapes (e.g. the B=2,S=8,D=32 test below) a fused
    # XLA max+concat is faster than a standalone pallas_call; this kernel is
    # sized for realistic B/S/D.
    out = pl.pallas_call(
        _seq_pool_kernel,
        out_shape=jax.ShapeDtypeStruct((B, 2, D), inputs.dtype),
        grid_spec=pltpu.PrefetchScalarGridSpec(
            num_scalar_prefetch=0,
            grid=grid,
            in_specs=[pl.BlockSpec((tb, ts, td), lambda b, d, s: (b, s, d))],
            out_specs=pl.BlockSpec((tb, 2, td), lambda b, d, s: (b, 0, d)),
            scratch_shapes=[pltpu.VMEM((tb, td), jnp.float32)],
        ),
        compiler_params=pltpu.CompilerParams(
            dimension_semantics=("parallel", "parallel", "arbitrary"),
            vmem_limit_bytes=32 * 1024 * 1024,
        ),
    )(inputs)

    # (B, 2, D) -> (B, 2*D) is contiguous and matches torch.cat([m, m], -1).
    return out.reshape(B, 2 * D)


def sequential_pooling_ref(inputs):
    """Pure-JAX reference mirroring the torch module (both branches are max)."""
    m = jnp.max(inputs, axis=1)
    return jnp.concatenate([m, m], axis=-1)


if __name__ == "__main__":
    # Small shapes consistent with the module: batch=2, seq=8, hidden=32.
    key = jax.random.PRNGKey(0)
    x = jax.random.normal(key, (2, 8, 32), dtype=jnp.float32)

    out = sequential_pooling(x)
    out = jax.block_until_ready(out)

    ref = sequential_pooling_ref(x)
    assert out.shape == (2, 64)
    assert jnp.allclose(out, ref, atol=1e-6), "mismatch vs reference"

    print("KERNEL_OK")
</pallas_src>

<mosaic_0001>
module attributes {stable_mosaic.version = 11 : i64} {
  func.func @_seq_pool_kernel(%arg0: i32, %arg1: i32, %arg2: i32, %arg3: memref<2x8x32xf32, #tpu.memory_space<vmem>>, %arg4: memref<2x2x32xf32, #tpu.memory_space<vmem>>, %arg5: memref<2x32xf32, #tpu.memory_space<vmem>>) attributes {dimension_semantics = [#tpu.dimension_semantics<parallel>, #tpu.dimension_semantics<parallel>, #tpu.dimension_semantics<arbitrary>], iteration_bounds = array<i64: 1, 1, 1>, scalar_prefetch = 0 : i64, scratch_operands = 1 : i64, tpu.core_type = #tpu.core_type<tc>, window_params = [{transform_indices = @transform_0, window_bounds = array<i64: 2, 8, 32>}, {transform_indices = @transform_1, window_bounds = array<i64: 2, 2, 32>}]} {
    %c0_i32 = arith.constant 0 : i32
    %0 = arith.cmpi eq, %arg2, %c0_i32 : i32
    %1 = arith.extui %0 : i1 to i32
    %c0_i32_0 = arith.constant 0 : i32
    %2 = arith.cmpi ne, %1, %c0_i32_0 : i32
    scf.if %2 {
      %cst_9 = arith.constant 0xFF800000 : f32
      %11 = vector.broadcast %cst_9 : f32 to vector<2x32xf32>
      %c0_10 = arith.constant 0 : index
      %c0_11 = arith.constant 0 : index
      %12 = vector.load %arg5[%c0_10, %c0_11] : memref<2x32xf32, #tpu.memory_space<vmem>>, vector<2x32xf32>
      tpu.vector_store %arg5[%c0_10, %c0_11], %11 {strides = array<i32>} : memref<2x32xf32, #tpu.memory_space<vmem>>, vector<2x32xf32>,
    } else {
    }
    %c0 = arith.constant 0 : index
    %c0_1 = arith.constant 0 : index
    %c0_2 = arith.constant 0 : index
    %3 = vector.load %arg3[%c0, %c0_1, %c0_2] : memref<2x8x32xf32, #tpu.memory_space<vmem>>, vector<2x8x32xf32>
    %cst = arith.constant dense<0xFF800000> : vector<2x32xf32>
    %4 = vector.multi_reduction <maximumf>, %3, %cst [1] : vector<2x8x32xf32> to vector<2x32xf32>
    %c0_3 = arith.constant 0 : index
    %c0_4 = arith.constant 0 : index
    %5 = vector.load %arg5[%c0_3, %c0_4] : memref<2x32xf32, #tpu.memory_space<vmem>>, vector<2x32xf32>
    %6 = arith.maximumf %5, %4 : vector<2x32xf32>
    %c0_5 = arith.constant 0 : index
    %c0_6 = arith.constant 0 : index
    %7 = vector.load %arg5[%c0_5, %c0_6] : memref<2x32xf32, #tpu.memory_space<vmem>>, vector<2x32xf32>
    tpu.vector_store %arg5[%c0_5, %c0_6], %6 {strides = array<i32>} : memref<2x32xf32, #tpu.memory_space<vmem>>, vector<2x32xf32>,
    %c0_i32_7 = arith.constant 0 : i32
    %8 = arith.cmpi eq, %arg2, %c0_i32_7 : i32
    %9 = arith.extui %8 : i1 to i32
    %c0_i32_8 = arith.constant 0 : i32
    %10 = arith.cmpi ne, %9, %c0_i32_8 : i32
    scf.if %10 {
      %c0_9 = arith.constant 0 : index
      %c0_10 = arith.constant 0 : index
      %11 = vector.load %arg5[%c0_9, %c0_10] : memref<2x32xf32, #tpu.memory_space<vmem>>, vector<2x32xf32>
      %12 = vector.shape_cast %11 : vector<2x32xf32> to vector<2x1x32xf32>
      %13 = vector.shape_cast %12 : vector<2x1x32xf32> to vector<2x1x32xf32>
      %14 = vector.broadcast %13 : vector<2x1x32xf32> to vector<2x2x32xf32>
      %c0_11 = arith.constant 0 : index
      %c0_12 = arith.constant 0 : index
      %c0_13 = arith.constant 0 : index
      %15 = vector.load %arg4[%c0_11, %c0_12, %c0_13] : memref<2x2x32xf32, #tpu.memory_space<vmem>>, vector<2x2x32xf32>
      tpu.vector_store %arg4[%c0_11, %c0_12, %c0_13], %14 {strides = array<i32>} : memref<2x2x32xf32, #tpu.memory_space<vmem>>, vector<2x2x32xf32>,
    } else {
    }
    return
  }
  func.func @transform_0(%arg0: i32, %arg1: i32, %arg2: i32) -> (i32, i32, i32) {
    %c0_i32 = arith.constant 0 : i32
    return %arg0, %arg2, %arg1 : i32, i32, i32
  }
  func.func @transform_1(%arg0: i32, %arg1: i32, %arg2: i32) -> (i32, i32, i32) {
    %c0_i32 = arith.constant 0 : i32
    %c0_i32_0 = arith.constant 0 : i32
    return %arg0, %c0_i32, %arg1 : i32, i32, i32
  }
}

</mosaic_0001>

<llo_original>
// kernel: tpu_custom_call.1
$region0: #{tpu_custom_call.1}
  #allocation0 [shape = 'u32[]', space=smem, size = 0x4, offset = 0x4, fixed_abs, tag = 'smem constant byte address 0x4 - core index']
  #allocation1 [shape = 'u32[144,128]{1,0:T(1,128)}', space=vmem, size = 0x12000, scoped, tag = 'internal scratch']
  #allocation2 [shape = 'f32[2,32]{1,0:T(2,128)}', space=vmem, size = 0x400, scoped, tag = 'scratch operand']
  %s0 = inlined_call_operand.hbm [shape: f32[2,8,32], index: 0, kind: input, shape index: {}]
  %s1 = inlined_call_operand.hbm [shape: f32[2,2,32], index: 1, kind: output, shape index: {}]
  %s2 = sld [smem:[#allocation0]]
  $region26: #{tpu_custom_call.1} parent=0
    _
  %s4 = ssub.s32 1, %s2
  %s5 = scalar_select 0, %s4, %s2
  $region1: #{tpu_custom_call.1} parent=0
    #allocation3 [shape = 'u8[8192]{0}', space=vmem, size = 0x2000, scoped, tag = 'input window, operand 0, single buffered']
    #allocation4 [shape = 's32[1]{0}', space=sflag, size = 0x4, scoped, tag = 'scoped memory for tpu_custom_call.1']
    #allocation5 [shape = 's32[1]{0}', space=sflag, size = 0x4, scoped, tag = 'scoped memory for tpu_custom_call.1']
    #allocation6 [shape = 'u8[2048]{0}', space=vmem, size = 0x800, scoped, tag = 'output window, operand 0, single buffered']
    %6 = vsyncpa [#allocation4], 0
    %7 = vsyncpa [#allocation5], 0
    // Predicated region
    $region2: #{tpu_custom_call.1} parent=1 // pred_check
      _
    $region3: #{tpu_custom_call.1} parent=1 // pred_check_branch
      %9 = sbr.rel (0) target = $region5
    $region4: #{tpu_custom_call.1} parent=1 // pred_region
      %s11 = ssub.s32 256, 256
      %12 = vsyncadd [#allocation4], %s11
      %s13 = sshll.u32 [#allocation3], 4
      %s14 = int_to_ptr.vmem [resolvable:$true] %s13
      %19 = dma.hbm_to_vmem [thread:$0]  %s0, 256, %s14, [#allocation4], 128, 128, 8
    $region5: #{tpu_custom_call.1} parent=1 // pred_fallthru
      _
    // Predicated region
    $region6: #{tpu_custom_call.1} parent=1 // pred_check
      _
    $region7: #{tpu_custom_call.1} parent=1 // pred_check_branch
      %21 = sbr.rel (0) target = $region9
    $region8: #{tpu_custom_call.1} parent=1 // pred_region
      %22 = dma.done [#allocation4], 256
    $region9: #{tpu_custom_call.1} parent=1 // pred_fallthru
      _
    %p23 = scmp.eq.s32.totalorder 0, 0
    // Predicated region
    $region10: #{tpu_custom_call.1} parent=1 // pred_check
      %p24 = pneg %p23
    $region11: #{tpu_custom_call.1} parent=1 // pred_check_branch
      %26 = sbr.rel (%p24) target = $region13
    $region12: #{tpu_custom_call.1} parent=1 // pred_region
      %vm27 = vcmask 254976
      %28 = vst.msk [vmem:[#allocation2] sm:$0x3] %vm27, -inf
    $region13: #{tpu_custom_call.1} parent=1 // pred_fallthru
      _
    %v29 = vld [vmem:[#allocation3] sm:$0xff]
    %v30 = vld [vmem:[#allocation3 + $0x8] sm:$0xff]
    %vm31 = vcmask 261120
    %v32 = vsel %vm31, %v29, -inf
    %v33 = vrot.slane %v32, 4
    %v34 = vmax.f32 %v32, %v33
    %v35 = vrot.slane %v34, 2
    %v36 = vmax.f32 %v34, %v35
    %v37 = vrot.slane %v36, 1
    %v38 = vmax.f32 %v36, %v37
    %v39 = vsel %vm31, %v30, -inf
    %v40 = vrot.slane %v39, 4
    %v41 = vmax.f32 %v39, %v40
    %v42 = vrot.slane %v41, 2
    %v43 = vmax.f32 %v41, %v42
    %v44 = vrot.slane %v43, 1
    %v45 = vmax.f32 %v43, %v44
    %v46 = vld [vmem:[#allocation2] sm:$0x3]
    %vm49 = vcmask 1041409
    %v50 = vsel %vm49, %v45, %v38
    %v52 = vmax.f32 %v46, %v50
    %vm53 = vcmask 254976
    %54 = vst.msk [vmem:[#allocation2] sm:$0x3] %vm53, %v52
    // Predicated region
    $region14: #{tpu_custom_call.1} parent=1 // pred_check
      %p55 = pneg %p23
    $region15: #{tpu_custom_call.1} parent=1 // pred_check_branch
      %57 = sbr.rel (%p55) target = $region17
    $region16: #{tpu_custom_call.1} parent=1 // pred_region
      %v58 = vld [vmem:[#allocation2] sm:$0x3]
      %v61 = vunpack.c.l.s4 1966171168
      %v62 = vunpack.c.0.s8 %v61
      %v63 = vlaneseq
      %v64 = vshrl.u32 %v63, 7
      %v65 = vsub.s32 %v62, %v64
      %v66 = vrot.slane %v58, %v65
      %v67 = vcombine.high %v66, %v66
      %v69 = vunpack.c.l.s4 1966171168
      %v70 = vunpack.c.0.s8 %v69
      %v71 = vlaneseq
      %v72 = vshrl.u32 %v71, 7
      %v73 = vsub.s32 %v70, %v72
      %v74 = vrot.slane %v66, %v73
      %v76 = vunpack.c.l.s4 1966171168
      %v77 = vunpack.c.0.s8 %v76
      %v78 = vlaneseq
      %v79 = vshrl.u32 %v78, 7
      %v80 = vsub.s32 %v77, %v79
      %v81 = vrot.slane %v67, %v80
      %v82 = vlaneseq
      %v83 = vshrl.u32 %v82, 7
      %v84 = vsub.s32 0, %v83
      %v85 = vrot.slane %v74, %v84
      %v86 = vlaneseq
      %v87 = vshrl.u32 %v86, 7
      %v88 = vsub.s32 0, %v87
      %v89 = vrot.slane %v81, %v88
      %92 = vst.msk [vmem:[#allocation6] sm:$0x3] %vm53, %v85
      %93 = vst.msk [vmem:[#allocation6 + $0x2] sm:$0x3] %vm53, %v89
    $region17: #{tpu_custom_call.1} parent=1 // pred_fallthru
      _
    // Predicated region
    $region18: #{tpu_custom_call.1} parent=1 // pred_check
      _
    $region19: #{tpu_custom_call.1} parent=1 // pred_check_branch
      %95 = sbr.rel (0) target = $region21
    $region20: #{tpu_custom_call.1} parent=1 // pred_region
      %s97 = ssub.s32 64, 64
      %98 = vsyncadd [#allocation5], %s97
      %s99 = sshll.u32 [#allocation6], 4
      %s100 = int_to_ptr.vmem [resolvable:$true] %s99
      %105 = dma.vmem_to_hbm [thread:$0]  %s100, 64, %s1, [#allocation5], 32, 32, 2
    $region21: #{tpu_custom_call.1} parent=1 // pred_fallthru
      _
    // Predicated region
    $region22: #{tpu_custom_call.1} parent=1 // pred_check
      _
    $region23: #{tpu_custom_call.1} parent=1 // pred_check_branch
      %107 = sbr.rel (0) target = $region25
    $region24: #{tpu_custom_call.1} parent=1 // pred_region
      %108 = dma.done [#allocation5], 64
    $region25: #{tpu_custom_call.1} parent=1 // pred_fallthru
      _
    %109 = vsyncpa [#allocation4], 1
    %110 = vsyncpa [#allocation5], 1

</llo_original>
